<compile_context>
chip_gen: v6e
topology: v6e:2x2x1
jax: 0.10.0
libtpu: 0.0.40
codegen_flags: <defaults>
</compile_context>

<pallas_src>
import functools

import jax
import jax.numpy as jnp
from jax.experimental import pallas as pl
from jax.experimental.pallas import tpu as pltpu


def _hsa_attention_kernel(q_ref, kpt_ref, vp_ref, o_ref, acc_ref, *, matmul_dtype):
    # q_ref:   (Bt, C, HW)    queries, channels-first, spatial flattened (HW on lanes)
    # kpt_ref: (Bt, Lkt, C)   pooled keys, pre-transposed in the wrapper
    # vp_ref:  (Bt, C, Lkt)   pooled values
    # o_ref:   (Bt, C, HW)
    # acc_ref: (Bt, C, HW) f32 scratch, accumulates over pooled-key (Lk) tiles
    lk = pl.program_id(1)

    @pl.when(lk == 0)
    def _():
        acc_ref[...] = jnp.zeros_like(acc_ref)

    q = q_ref[...].astype(matmul_dtype)      # (Bt, C, HW)
    kpt = kpt_ref[...].astype(matmul_dtype)  # (Bt, Lkt, C)
    vp = vp_ref[...].astype(matmul_dtype)    # (Bt, C, Lkt)

    # S^T[b, k, q] = sum_c K_pie[b, c, k] * Q[b, c, q]   (HW stays on the lane axis)
    s_t = jnp.einsum('bkc,bcq->bkq', kpt, q,
                     preferred_element_type=jnp.float32)          # (Bt, Lkt, HW)

    # torch: softmax(bmm(Q_pie, K_pie), dim=1) normalizes over the *query* axis,
    # which is the last axis of the transposed scores.  f32 softmax math.
    s_t = s_t - jnp.max(s_t, axis=-1, keepdims=True)
    e = jnp.exp(s_t)
    a = e * pl.reciprocal(jnp.sum(e, axis=-1, keepdims=True), approx=True)

    # out[b, c, q] += sum_k V_pie[b, c, k] * A[b, k, q]
    #   == torch.bmm(V_pie, attention.permute(0, 2, 1)), accumulated over Lk tiles.
    acc_ref[...] += jnp.einsum('bck,bkq->bcq', vp, a.astype(matmul_dtype),
                               preferred_element_type=jnp.float32)

    @pl.when(lk == pl.num_programs(1) - 1)
    def _():
        o_ref[...] = acc_ref[...].astype(o_ref.dtype)


def hsa_self_attention(K, Q, V, poolscale, *, matmul_dtype=jnp.bfloat16,
                       batch_block=None):
    """Forward pass of selfAttention(poolscale, name='HSA'). Inputs are NCHW."""
    B, C, H, W = Q.shape
    assert K.shape == Q.shape == V.shape
    sh, sw = poolscale, poolscale * 4
    # torch.nn.AvgPool2d (ceil_mode=False) silently drops trailing rows/cols that
    # do not fill a full window; mirror that by truncating before pooling.
    Hk, Wk = H // sh, W // sw
    HW, Lk = H * W, Hk * Wk

    def pool(x):  # AvgPool2d as reshape + mean (no dense pooling matrix)
        x = x[:, :, :Hk * sh, :Wk * sw]
        return x.reshape(B, C, Hk, sh, Wk, sw).mean(axis=(3, 5))   # (B, C, Hk, Wk)

    Kp_t = pool(K).reshape(B, C, Lk).transpose(0, 2, 1)  # (B, Lk, C) pre-transposed
    Vp = pool(V).reshape(B, C, Lk)                       # (B, C, Lk)
    Qf = Q.reshape(B, C, HW)                             # (B, C, HW)

    # --- pick batch block: amortize per-step overhead, but keep >=2 grid steps
    #     when possible so both v7x TensorCores get work; stay inside VMEM budget.
    if batch_block is None:
        bytes_per_b = 4 * (3 * C * HW + 3 * Lk * HW + 2 * C * Lk)  # rough f32 est.
        budget = 24 * 1024 * 1024
        batch_block = max(1, min(B, budget // max(bytes_per_b, 1)))
        while batch_block > 1 and (B // batch_block) < 2:
            batch_block -= 1
        while B % batch_block:
            batch_block -= 1
    Bt = batch_block

    # --- tile the pooled-key axis only when it is large and 128-aligned
    #     (bounds the (Lkt, HW) score/softmax intermediates, e.g. for v7x VMEM).
    lk_block = Lk
    if Lk > 512:
        for cand in (512, 256, 128):
            if Lk % cand == 0:
                lk_block = cand
                break
    n_lk = Lk // lk_block

    kernel = functools.partial(_hsa_attention_kernel, matmul_dtype=matmul_dtype)

    out = pl.pallas_call(
        kernel,
        out_shape=jax.ShapeDtypeStruct((B, C, HW), Q.dtype),
        grid_spec=pltpu.PrefetchScalarGridSpec(
            num_scalar_prefetch=0,
            grid=(B // Bt, n_lk),
            in_specs=[
                pl.BlockSpec((Bt, C, HW), lambda b, k: (b, 0, 0)),        # Q
                pl.BlockSpec((Bt, lk_block, C), lambda b, k: (b, k, 0)),  # pooled K^T
                pl.BlockSpec((Bt, C, lk_block), lambda b, k: (b, 0, k)),  # pooled V
            ],
            out_specs=pl.BlockSpec((Bt, C, HW), lambda b, k: (b, 0, 0)),
            scratch_shapes=[pltpu.VMEM((Bt, C, HW), jnp.float32)],
        ),
        compiler_params=pltpu.CompilerParams(
            dimension_semantics=("parallel", "arbitrary"),
            vmem_limit_bytes=48 * 1024 * 1024,
        ),
    )(Qf, Kp_t, Vp)
    return out.reshape(B, C, H, W)


def _reference(K, Q, V, poolscale):
    # Pure-JAX reference mirroring the PyTorch forward (for the sanity check).
    B, C, H, W = Q.shape
    sh, sw = poolscale, poolscale * 4
    Hk, Wk = H // sh, W // sw

    def pool(x):
        x = x[:, :, :Hk * sh, :Wk * sw]
        return x.reshape(B, C, Hk, sh, Wk, sw).mean(axis=(3, 5))

    Kp = pool(K).reshape(B, C, Hk * Wk)
    Vp = pool(V).reshape(B, C, Hk * Wk)
    Qp = Q.reshape(B, C, H * W).transpose(0, 2, 1)
    att = jax.nn.softmax(jnp.einsum('bqc,bck->bqk', Qp, Kp), axis=1)
    out = jnp.einsum('bck,bqk->bcq', Vp, att)
    return out.reshape(B, C, H, W)


if __name__ == "__main__":
    key = jax.random.PRNGKey(0)
    kK, kQ, kV = jax.random.split(key, 3)
    B, C, H, W = 2, 4, 16, 16
    poolscale = 2  # pool window (2, 8) -> pooled spatial (8, 2), Lk = 16

    K = jax.random.normal(kK, (B, C, H, W), dtype=jnp.float32)
    Q = jax.random.normal(kQ, (B, C, H, W), dtype=jnp.float32)
    V = jax.random.normal(kV, (B, C, H, W), dtype=jnp.float32)

    ref = _reference(K, Q, V, poolscale)

    # Exactness check with f32 matmul operands (tight tolerance).
    out_f32 = hsa_self_attention(K, Q, V, poolscale, matmul_dtype=jnp.float32)
    jax.block_until_ready(out_f32)
    assert out_f32.shape == (B, C, H, W) and out_f32.dtype == jnp.float32
    assert jnp.allclose(out_f32, ref, atol=2e-3, rtol=2e-3), \
        float(jnp.max(jnp.abs(out_f32 - ref)))

    # Default production path: bf16 MXU operands, f32 accumulation/softmax.
    out = hsa_self_attention(K, Q, V, poolscale)
    jax.block_until_ready(out)
    assert out.shape == (B, C, H, W) and out.dtype == jnp.float32
    assert jnp.allclose(out, ref, atol=3e-2, rtol=3e-2), \
        float(jnp.max(jnp.abs(out - ref)))

    print("KERNEL_OK")
</pallas_src>

<mosaic_0001>
module attributes {stable_mosaic.version = 11 : i64} {
  func.func @_hsa_attention_kernel(%arg0: i32, %arg1: i32, %arg2: memref<1x4x256xf32, #tpu.memory_space<vmem>>, %arg3: memref<1x16x4xf32, #tpu.memory_space<vmem>>, %arg4: memref<1x4x16xf32, #tpu.memory_space<vmem>>, %arg5: memref<1x4x256xf32, #tpu.memory_space<vmem>>, %arg6: memref<1x4x256xf32, #tpu.memory_space<vmem>>) attributes {dimension_semantics = [#tpu.dimension_semantics<parallel>, #tpu.dimension_semantics<arbitrary>], iteration_bounds = array<i64: 2, 1>, scalar_prefetch = 0 : i64, scratch_operands = 1 : i64, tpu.core_type = #tpu.core_type<tc>, window_params = [{transform_indices = @transform_0, window_bounds = array<i64: 1, 4, 256>}, {transform_indices = @transform_1, window_bounds = array<i64: 1, 16, 4>}, {transform_indices = @transform_2, window_bounds = array<i64: 1, 4, 16>}, {transform_indices = @transform_3, window_bounds = array<i64: 1, 4, 256>}]} {
    %c0_i32 = arith.constant 0 : i32
    %0 = arith.cmpi eq, %arg1, %c0_i32 : i32
    %1 = arith.extui %0 : i1 to i32
    %c0_i32_0 = arith.constant 0 : i32
    %2 = arith.cmpi ne, %1, %c0_i32_0 : i32
    scf.if %2 {
      %cst_20 = arith.constant 0.000000e+00 : f32
      %24 = vector.broadcast %cst_20 : f32 to vector<1x4x256xf32>
      %c0_21 = arith.constant 0 : index
      %c0_22 = arith.constant 0 : index
      %c0_23 = arith.constant 0 : index
      %25 = vector.load %arg6[%c0_21, %c0_22, %c0_23] : memref<1x4x256xf32, #tpu.memory_space<vmem>>, vector<1x4x256xf32>
      tpu.vector_store %arg6[%c0_21, %c0_22, %c0_23], %24 {strides = array<i32>} : memref<1x4x256xf32, #tpu.memory_space<vmem>>, vector<1x4x256xf32>,
    } else {
    }
    %c0 = arith.constant 0 : index
    %c0_1 = arith.constant 0 : index
    %c0_2 = arith.constant 0 : index
    %3 = vector.load %arg2[%c0, %c0_1, %c0_2] : memref<1x4x256xf32, #tpu.memory_space<vmem>>, vector<1x4x256xf32>
    %c0_3 = arith.constant 0 : index
    %c0_4 = arith.constant 0 : index
    %c0_5 = arith.constant 0 : index
    %4 = vector.load %arg3[%c0_3, %c0_4, %c0_5] : memref<1x16x4xf32, #tpu.memory_space<vmem>>, vector<1x16x4xf32>
    %c0_6 = arith.constant 0 : index
    %c0_7 = arith.constant 0 : index
    %c0_8 = arith.constant 0 : index
    %5 = vector.load %arg4[%c0_6, %c0_7, %c0_8] : memref<1x4x16xf32, #tpu.memory_space<vmem>>, vector<1x4x16xf32>
    "tpu.trace_start"() <{level = 10 : i32, message = "bkc,bcq->bkq"}> : () -> ()
    %cst = arith.constant dense<0.000000e+00> : vector<1x16x256xf32>
    %6 = tpu.matmul %4, %3, %cst {dimension_numbers = #tpu.dot_dimension_numbers<[2], [1], [1], [2], [0, 0, 0, 1, 1, 2], [0], [0]>} : vector<1x16x4xf32>, vector<1x4x256xf32>, vector<1x16x256xf32> -> vector<1x16x256xf32>
    "tpu.trace_stop"() : () -> ()
    %cst_9 = arith.constant dense<0xFF800000> : vector<1x16xf32>
    %7 = vector.multi_reduction <maximumf>, %6, %cst_9 [2] : vector<1x16x256xf32> to vector<1x16xf32>
    %8 = vector.shape_cast %7 : vector<1x16xf32> to vector<1x16x1xf32>
    %9 = vector.broadcast %8 : vector<1x16x1xf32> to vector<1x16x256xf32>
    %10 = arith.subf %6, %9 : vector<1x16x256xf32>
    %11 = math.exp %10 : vector<1x16x256xf32>
    %cst_10 = arith.constant dense<0.000000e+00> : vector<1x16xf32>
    %12 = vector.multi_reduction <add>, %11, %cst_10 [2] : vector<1x16x256xf32> to vector<1x16xf32>
    %13 = vector.shape_cast %12 : vector<1x16xf32> to vector<1x16x1xf32>
    %14 = tpu.reciprocal %13 {approx = true} : vector<1x16x1xf32> -> vector<1x16x1xf32>
    %15 = vector.broadcast %14 : vector<1x16x1xf32> to vector<1x16x256xf32>
    %16 = arith.mulf %11, %15 : vector<1x16x256xf32>
    %c0_11 = arith.constant 0 : index
    %c0_12 = arith.constant 0 : index
    %c0_13 = arith.constant 0 : index
    %17 = vector.load %arg6[%c0_11, %c0_12, %c0_13] : memref<1x4x256xf32, #tpu.memory_space<vmem>>, vector<1x4x256xf32>
    "tpu.trace_start"() <{level = 10 : i32, message = "bck,bkq->bcq"}> : () -> ()
    %cst_14 = arith.constant dense<0.000000e+00> : vector<1x4x256xf32>
    %18 = tpu.matmul %5, %16, %cst_14 {dimension_numbers = #tpu.dot_dimension_numbers<[2], [1], [1], [2], [0, 0, 0, 1, 1, 2], [0], [0]>} : vector<1x4x16xf32>, vector<1x16x256xf32>, vector<1x4x256xf32> -> vector<1x4x256xf32>
    "tpu.trace_stop"() : () -> ()
    %19 = arith.addf %17, %18 : vector<1x4x256xf32>
    %c0_15 = arith.constant 0 : index
    %c0_16 = arith.constant 0 : index
    %c0_17 = arith.constant 0 : index
    %20 = vector.load %arg6[%c0_15, %c0_16, %c0_17] : memref<1x4x256xf32, #tpu.memory_space<vmem>>, vector<1x4x256xf32>
    tpu.vector_store %arg6[%c0_15, %c0_16, %c0_17], %19 {strides = array<i32>} : memref<1x4x256xf32, #tpu.memory_space<vmem>>, vector<1x4x256xf32>,
    %c0_i32_18 = arith.constant 0 : i32
    %21 = arith.cmpi eq, %arg1, %c0_i32_18 : i32
    %22 = arith.extui %21 : i1 to i32
    %c0_i32_19 = arith.constant 0 : i32
    %23 = arith.cmpi ne, %22, %c0_i32_19 : i32
    scf.if %23 {
      %c0_20 = arith.constant 0 : index
      %c0_21 = arith.constant 0 : index
      %c0_22 = arith.constant 0 : index
      %24 = vector.load %arg6[%c0_20, %c0_21, %c0_22] : memref<1x4x256xf32, #tpu.memory_space<vmem>>, vector<1x4x256xf32>
      %c0_23 = arith.constant 0 : index
      %c0_24 = arith.constant 0 : index
      %c0_25 = arith.constant 0 : index
      %25 = vector.load %arg5[%c0_23, %c0_24, %c0_25] : memref<1x4x256xf32, #tpu.memory_space<vmem>>, vector<1x4x256xf32>
      tpu.vector_store %arg5[%c0_23, %c0_24, %c0_25], %24 {strides = array<i32>} : memref<1x4x256xf32, #tpu.memory_space<vmem>>, vector<1x4x256xf32>,
    } else {
    }
    return
  }
  func.func @transform_0(%arg0: i32, %arg1: i32) -> (i32, i32, i32) {
    %c0_i32 = arith.constant 0 : i32
    %c0_i32_0 = arith.constant 0 : i32
    %c0_i32_1 = arith.constant 0 : i32
    return %arg0, %c0_i32, %c0_i32_0 : i32, i32, i32
  }
  func.func @transform_1(%arg0: i32, %arg1: i32) -> (i32, i32, i32) {
    %c0_i32 = arith.constant 0 : i32
    %c0_i32_0 = arith.constant 0 : i32
    return %arg0, %arg1, %c0_i32 : i32, i32, i32
  }
  func.func @transform_2(%arg0: i32, %arg1: i32) -> (i32, i32, i32) {
    %c0_i32 = arith.constant 0 : i32
    %c0_i32_0 = arith.constant 0 : i32
    return %arg0, %c0_i32, %arg1 : i32, i32, i32
  }
  func.func @transform_3(%arg0: i32, %arg1: i32) -> (i32, i32, i32) {
    %c0_i32 = arith.constant 0 : i32
    %c0_i32_0 = arith.constant 0 : i32
    %c0_i32_1 = arith.constant 0 : i32
    return %arg0, %c0_i32, %c0_i32_0 : i32, i32, i32
  }
}

</mosaic_0001>

<llo_original>
// kernel: tpu_custom_call.1
$region0: #{tpu_custom_call.1}
  #allocation0 [shape = 'u32[]', space=smem, size = 0x4, offset = 0x4, fixed_abs, tag = 'smem constant byte address 0x4 - core index']
  #allocation1 [shape = 'u32[144,128]{1,0:T(1,128)}', space=vmem, size = 0x12000, scoped, tag = 'internal scratch']
  #allocation2 [shape = 'f32[1,4,256]{2,1,0:T(4,128)}', space=vmem, size = 0x1000, scoped, tag = 'scratch operand']
  %s0 = inlined_call_operand.vmem [shape: f32[2,4,256], index: 0, kind: input, shape index: {}]
  %s1 = inlined_call_operand.vmem [shape: f32[2,16,4], index: 1, kind: input, shape index: {}]
  %s2 = inlined_call_operand.vmem [shape: f32[2,4,16], index: 2, kind: input, shape index: {}]
  %s3 = inlined_call_operand.hbm [shape: f32[2,4,256], index: 3, kind: output, shape index: {}]
  %s4 = sld [smem:[#allocation0]]
  $region53: #{tpu_custom_call.1} parent=0
    _
  %s6 = ssub.s32 1, %s4
  %s7 = scalar_select 0, %s6, %s4
  $region1: #{tpu_custom_call.1} parent=0
    #allocation3 [shape = 'u8[8192]{0}', space=vmem, size = 0x2000, scoped, tag = 'output window, operand 0']
    #allocation4 [shape = 's32[2]{0}', space=sflag, size = 0x8, scoped, tag = 'scoped memory for tpu_custom_call.1']
    %8 = vsyncpa [#allocation4], 0
    %s9 = scalar_lea.sflag [#allocation4], 1
    %10 = vsyncpa %s9, 0
    loop: start=0, step=1, limit=4
    $region2: #{tpu_custom_call.1} parent=1 // loop_pre_header
      _
    $region3: #{tpu_custom_call.1} parent=1 // loop_header
      %s12 = sphi 0, %s16
      %p13 = scmp.ge.s32.totalorder %s12, 4
      %s19 = sphi 0, %s31
      %s20 = sphi 0, %s27
      %s21 = sphi 0, %s19
      %s22 = sphi 0, %s20
      %s23 = sphi 0, %s21
      %s24 = sphi 0, %s22
      %s34 = sphi 0, %s36
      %s37 = sphi 0, %s34
      %s38 = sphi 0, %s37
      %s54 = sphi 0, %s38
      %s62 = sphi 0, %s64
      %s65 = sphi 0, %s62
      %s66 = sphi 0, %s65
      %s82 = sphi 0, %s66
      %s90 = sphi 0, %s92
      %s93 = sphi 0, %s90
      %s94 = sphi 0, %s93
      %s110 = sphi 0, %s94
      %s116 = sphi 0, %s118
      %s119 = sphi 0, %s116
      %s120 = sphi 0, %s119
      %s136 = sphi 0, %s120
    $region4: #{tpu_custom_call.1} parent=1 // loop_header_branch
      %15 = sbr.rel (%p13) target = $region8
    $region5: #{tpu_custom_call.1} parent=1 // loop_body
      %s17 = ssub.s32 %s12, 1
      %s18 = ssub.s32 %s12, 2
      %s25 = sadd.s32 1, %s20
      %p26 = scmp.ge.s32.totalorder %s25, 1
      %s27 = scalar_select %p26, 0, %s25
      %s28 = sadd.s32 1, %s19
      %s29 = scalar_select %p26, %s28, %s19
      %p30 = scmp.ge.s32.totalorder %s29, 2
      %s31 = scalar_select %p30, 0, %s29
      %s32 = ssub.s32 %s19, %s31
      %p33 = scmp.eq.s32.totalorder %s32, 0
      %s35 = sadd.s32 %s34, 1
      %s36 = scalar_select %p33, %s34, %s35
      %p39 = pneg %p33
      %p40 = scmp.eq.s32.totalorder %s12, 1
      %p41 = por %p39, %p40
      %p42 = scmp.ne.s32.totalorder %s34, %s37
      %p43 = scmp.eq.s32.totalorder %s12, 0
      %p44 = por %p42, %p43
      %p45 = scmp.ne.s32.totalorder %s34, %s37
      %p46 = scmp.eq.s32.totalorder %s17, 1
      %p47 = por %p45, %p46
      %p48 = scmp.ne.s32.totalorder %s37, %s38
      %p49 = scmp.eq.s32.totalorder %s17, 0
      %p50 = por %p48, %p49
      %p51 = scmp.ne.s32.totalorder %s37, %s38
      %p52 = scmp.eq.s32.totalorder %s18, 1
      %p53 = por %p51, %p52
      %p55 = scmp.ne.s32.totalorder %s38, %s54
      %p56 = scmp.eq.s32.totalorder %s18, 0
      %p57 = por %p55, %p56
      %s58 = ssub.s32 %s19, %s31
      %s59 = ssub.s32 %s20, %s27
      %s60 = sor.u32 %s58, %s59
      %p61 = scmp.eq.s32.totalorder %s60, 0
      %s63 = sadd.s32 %s62, 1
      %s64 = scalar_select %p61, %s62, %s63
      %p67 = pneg %p61
      %p68 = scmp.eq.s32.totalorder %s12, 1
      %p69 = por %p67, %p68
      %p70 = scmp.ne.s32.totalorder %s62, %s65
      %p71 = scmp.eq.s32.totalorder %s12, 0
      %p72 = por %p70, %p71
      %p73 = scmp.ne.s32.totalorder %s62, %s65
      %p74 = scmp.eq.s32.totalorder %s17, 1
      %p75 = por %p73, %p74
      %p76 = scmp.ne.s32.totalorder %s65, %s66
      %p77 = scmp.eq.s32.totalorder %s17, 0
      %p78 = por %p76, %p77
      %p79 = scmp.ne.s32.totalorder %s65, %s66
      %p80 = scmp.eq.s32.totalorder %s18, 1
      %p81 = por %p79, %p80
      %p83 = scmp.ne.s32.totalorder %s66, %s82
      %p84 = scmp.eq.s32.totalorder %s18, 0
      %p85 = por %p83, %p84
      %s86 = ssub.s32 %s19, %s31
      %s87 = ssub.s32 %s20, %s27
      %s88 = sor.u32 %s86, %s87
      %p89 = scmp.eq.s32.totalorder %s88, 0
      %s91 = sadd.s32 %s90, 1
      %s92 = scalar_select %p89, %s90, %s91
      %p95 = pneg %p89
      %p96 = scmp.eq.s32.totalorder %s12, 1
      %p97 = por %p95, %p96
      %p98 = scmp.ne.s32.totalorder %s90, %s93
      %p99 = scmp.eq.s32.totalorder %s12, 0
      %p100 = por %p98, %p99
      %p101 = scmp.ne.s32.totalorder %s90, %s93
      %p102 = scmp.eq.s32.totalorder %s17, 1
      %p103 = por %p101, %p102
      %p104 = scmp.ne.s32.totalorder %s93, %s94
      %p105 = scmp.eq.s32.totalorder %s17, 0
      %p106 = por %p104, %p105
      %p107 = scmp.ne.s32.totalorder %s93, %s94
      %p108 = scmp.eq.s32.totalorder %s18, 1
      %p109 = por %p107, %p108
      %p111 = scmp.ne.s32.totalorder %s94, %s110
      %p112 = scmp.eq.s32.totalorder %s18, 0
      %p113 = por %p111, %p112
      %s114 = ssub.s32 %s19, %s31
      %p115 = scmp.eq.s32.totalorder %s114, 0
      %s117 = sadd.s32 %s116, 1
      %s118 = scalar_select %p115, %s116, %s117
      %p121 = pneg %p115
      %p122 = scmp.eq.s32.totalorder %s12, 1
      %p123 = por %p121, %p122
      %p124 = scmp.ne.s32.totalorder %s116, %s119
      %p125 = scmp.eq.s32.totalorder %s12, 0
      %p126 = por %p124, %p125
      %p127 = scmp.ne.s32.totalorder %s116, %s119
      %p128 = scmp.eq.s32.totalorder %s17, 1
      %p129 = por %p127, %p128
      %p130 = scmp.ne.s32.totalorder %s119, %s120
      %p131 = scmp.eq.s32.totalorder %s17, 0
      %p132 = por %p130, %p131
      %p133 = scmp.ne.s32.totalorder %s119, %s120
      %p134 = scmp.eq.s32.totalorder %s18, 1
      %p135 = por %p133, %p134
      %p137 = scmp.ne.s32.totalorder %s120, %s136
      %p138 = scmp.eq.s32.totalorder %s18, 0
      %p139 = por %p137, %p138
      %p140 = scmp.le.s32.totalorder 1, %s12
      %p141 = scmp.lt.s32.totalorder %s12, 3
      %p142 = pnand %p140, %p141
      %p143 = pneg %p142
      // Predicated region
      $region9: #{tpu_custom_call.1} parent=5 // pred_check
        _
      $region10: #{tpu_custom_call.1} parent=5 // pred_check_branch
        %145 = sbr.rel (%p142) target = $region12
      $region11: #{tpu_custom_call.1} parent=5 // pred_region
        %s146 = ssub.s32 %s12, 1
      $region12: #{tpu_custom_call.1} parent=5 // pred_fallthru
        _
      %p147 = scmp.lt.s32.totalorder %s12, 2
      // Predicated region
      $region13: #{tpu_custom_call.1} parent=5 // pred_check
        %p148 = pneg %p147
      $region14: #{tpu_custom_call.1} parent=5 // pred_check_branch
        %150 = sbr.rel (%p148) target = $region16
      $region15: #{tpu_custom_call.1} parent=5 // pred_region
        // Predicated region
        $region17: #{tpu_custom_call.1} parent=15 // pred_check
          %p151 = pneg %p44
        $region18: #{tpu_custom_call.1} parent=15 // pred_check_branch
          %153 = sbr.rel (%p151) target = $region20
        $region19: #{tpu_custom_call.1} parent=15 // pred_region
          %p154 = scmp.lt.s32.totalorder %s19, 1
          %s155 = scalar_select %p154, %s19, 1
          %s156 = smul.addr %s155, 2
          %s157 = smul.addr %s156, 4
          %s158 = scalar_lea.vmem %s0, %s157
        $region20: #{tpu_custom_call.1} parent=15 // pred_fallthru
          _
        // Predicated region
        $region21: #{tpu_custom_call.1} parent=15 // pred_check
          %p159 = pneg %p72
        $region22: #{tpu_custom_call.1} parent=15 // pred_check_branch
          %161 = sbr.rel (%p159) target = $region24
        $region23: #{tpu_custom_call.1} parent=15 // pred_region
          %s162 = smul.u32 2, %s20
          %p163 = scmp.lt.s32.totalorder %s19, 1
          %s164 = scalar_select %p163, %s19, 1
          %p165 = scmp.lt.s32.totalorder %s162, 1
          %s166 = scalar_select %p165, %s162, 1
          %s167 = smul.addr %s164, 2
          %s168 = sadd.s32 %s166, %s167
          %s169 = smul.addr %s168, 8
          %s170 = scalar_lea.vmem %s1, %s169
          %s171 = smul.u32 2, %s20
        $region24: #{tpu_custom_call.1} parent=15 // pred_fallthru
          _
        // Predicated region
        $region25: #{tpu_custom_call.1} parent=15 // pred_check
          %p172 = pneg %p100
        $region26: #{tpu_custom_call.1} parent=15 // pred_check_branch
          %174 = sbr.rel (%p172) target = $region28
        $region27: #{tpu_custom_call.1} parent=15 // pred_region
          %p175 = scmp.lt.s32.totalorder %s19, 1
          %s176 = scalar_select %p175, %s19, 1
          %p177 = scmp.lt.s32.totalorder %s20, 0
          %s178 = scalar_select %p177, %s20, 0
          %s179 = sadd.s32 %s178, %s176
          %s180 = smul.addr %s179, 4
          %s181 = scalar_lea.vmem %s2, %s180
        $region28: #{tpu_custom_call.1} parent=15 // pred_fallthru
          _
      $region16: #{tpu_custom_call.1} parent=5 // pred_fallthru
        _
      %p182 = scmp.le.s32.totalorder 1, %s12
      %p183 = scmp.lt.s32.totalorder %s12, 3
      %p184 = pnand %p182, %p183
      %p185 = pneg %p184
      // Predicated region
      $region29: #{tpu_custom_call.1} parent=5 // pred_check
        _
      $region30: #{tpu_custom_call.1} parent=5 // pred_check_branch
        %187 = sbr.rel (%p184) target = $region32
      $region31: #{tpu_custom_call.1} parent=5 // pred_region
        %s188 = ssub.s32 %s12, 1
        %p189 = scmp.lt.s32.totalorder %s21, 1
        %s190 = scalar_select %p189, %s21, 1
        %s191 = smul.addr %s190, 2
        %s192 = smul.addr %s191, 4
        %s193 = scalar_lea.vmem %s0, %s192
        %p194 = pneg %p50
        %p195 = pneg %p47
        %s196 = smul.u32 2, %s22
        %p197 = scmp.lt.s32.totalorder %s21, 1
        %s198 = scalar_select %p197, %s21, 1
        %p199 = scmp.lt.s32.totalorder %s196, 1
        %s200 = scalar_select %p199, %s196, 1
        %s201 = smul.addr %s198, 2
        %s202 = sadd.s32 %s200, %s201
        %s203 = smul.addr %s202, 8
        %s204 = scalar_lea.vmem %s1, %s203
        %p205 = pneg %p78
        %p206 = pneg %p75
        %p207 = scmp.lt.s32.totalorder %s21, 1
        %s208 = scalar_select %p207, %s21, 1
        %p209 = scmp.lt.s32.totalorder %s22, 0
        %s210 = scalar_select %p209, %s22, 0
        %s211 = sadd.s32 %s210, %s208
        %s212 = smul.addr %s211, 4
        %s213 = scalar_lea.vmem %s2, %s212
        %p214 = pneg %p106
        %p215 = pneg %p103
        %p216 = pneg %p132
        %p217 = pneg %p129
        %s218 = sand.u32 %s119, 1
        %s219 = scalar_lea.sflag [#allocation4], %s218
        %s220 = sand.u32 %s119, 1
        %s221 = smul.addr %s220, 8
        %s222 = scalar_lea.vmem [#allocation3], %s221
        %p223 = scmp.lt.s32.totalorder %s21, 1
        %s224 = scalar_select %p223, %s21, 1
        %s225 = smul.addr %s224, 2
        %s226 = smul.addr %s225, 4
        %s227 = scalar_lea.vmem %s0, %s226
        %s228 = smul.u32 2, %s22
        %p229 = scmp.lt.s32.totalorder %s21, 1
        %s230 = scalar_select %p229, %s21, 1
        %p231 = scmp.lt.s32.totalorder %s228, 1
        %s232 = scalar_select %p231, %s228, 1
        %s233 = smul.addr %s230, 2
        %s234 = sadd.s32 %s232, %s233
        %s235 = smul.addr %s234, 8
        %s236 = scalar_lea.vmem %s1, %s235
        %s237 = smul.u32 2, %s22
        %p238 = scmp.lt.s32.totalorder %s21, 1
        %s239 = scalar_select %p238, %s21, 1
        %p240 = scmp.lt.s32.totalorder %s22, 0
        %s241 = scalar_select %p240, %s22, 0
        %s242 = sadd.s32 %s241, %s239
        %s243 = smul.addr %s242, 4
        %s244 = scalar_lea.vmem %s2, %s243
        %p245 = scmp.eq.s32.totalorder %s22, 0
        // Predicated region
        $region33: #{tpu_custom_call.1} parent=31 // pred_check
          %p246 = pneg %p245
        $region34: #{tpu_custom_call.1} parent=31 // pred_check_branch
          %248 = sbr.rel (%p246) target = $region36
        $region35: #{tpu_custom_call.1} parent=31 // pred_region
          %249 = vst [vmem:[#allocation2] sm:$0xff] 0.0
        $region36: #{tpu_custom_call.1} parent=31 // pred_fallthru
          _
        %v250 = vld [vmem:[%s227] sm:$0xff]
        %v251 = vld [vmem:[%s236] sm:$0xff]
        %v252 = vld [vmem:[%s236 + $0x8] sm:$0xff]
        %v253 = vld [vmem:[%s244] sm:$0xf]
        %v255 = vcombine.high %v250, %v250
        %vm256 = vcmask 31744
        %v258 = vsel %vm256, %v251, 0
        %v261 = vsel %vm256, %v252, 0
        %vm263 = vcmask 1043456
        %v264 = vsel %vm263, %v250, 0
        %v266 = vsel %vm263, %v255, 0
        %268 = vmatprep.subr.mxu0 0.0
        %269 = vmatpush1.msra.mxu0 0.0
        %270 = vmatprep.subr.mxu0 0.0
        %271 = vmatpush1.msra.mxu0 0.0
        %272 = vmatprep.subr.mxu0 0.0
        %273 = vmatpush1.msra.mxu0 0.0
        %274 = vmatprep.subr.mxu0 0.0
        %275 = vmatpush1.msra.mxu0 0.0
        %276 = vmatprep.subr.mxu0 0.0
        %277 = vmatpush1.msra.mxu0 0.0
        %278 = vmatprep.subr.mxu0 0.0
        %279 = vmatpush1.msra.mxu0 0.0
        %280 = vmatprep.subr.mxu0 0.0
        %281 = vmatpush1.msra.mxu0 0.0
        %282 = vmatprep.subr.mxu0 0.0
        %283 = vmatpush1.msra.mxu0 0.0
        %284 = vmatprep.subr.mxu0 0.0
        %285 = vmatpush1.msra.mxu0 0.0
        %286 = vmatprep.subr.mxu0 0.0
        %287 = vmatpush1.msra.mxu0 0.0
        %288 = vmatprep.subr.mxu0 0.0
        %289 = vmatpush1.msra.mxu0 0.0
        %290 = vmatprep.subr.mxu0 0.0
        %291 = vmatpush1.msra.mxu0 0.0
        %292 = vmatprep.subr.mxu0 0.0
        %293 = vmatpush1.msra.mxu0 0.0
        %294 = vmatprep.subr.mxu0 0.0
        %295 = vmatpush1.msra.mxu0 0.0
        %296 = vmatprep.subr.mxu0 0.0
        %297 = vmatpush1.msra.mxu0 0.0
        %298 = vmatprep.subr.mxu0 %v266
        %299 = vmatpush1.msra.mxu0 %v264
        %300 = vmatprep.subr.mxu0 0.0
        %301 = vmatpush2.msra.mxu0 0.0
        %302 = vmatprep.subr.mxu0 0.0
        %303 = vmatpush2.msra.mxu0 0.0
        %304 = vmatprep.subr.mxu0 0.0
        %305 = vmatpush2.msra.mxu0 0.0
        %306 = vmatprep.subr.mxu0 0.0
        %307 = vmatpush2.msra.mxu0 0.0
        %308 = vmatprep.subr.mxu0 0.0
        %309 = vmatpush2.msra.mxu0 0.0
        %310 = vmatprep.subr.mxu0 0.0
        %311 = vmatpush2.msra.mxu0 0.0
        %312 = vmatprep.subr.mxu0 0.0
        %313 = vmatpush2.msra.mxu0 0.0
        %314 = vmatprep.subr.mxu0 0.0
        %315 = vmatpush2.msra.mxu0 0.0
        %316 = vmatprep.subr.mxu0 0.0
        %317 = vmatpush2.msra.mxu0 0.0
        %318 = vmatprep.subr.mxu0 0.0
        %319 = vmatpush2.msra.mxu0 0.0
        %320 = vmatprep.subr.mxu0 0.0
        %321 = vmatpush2.msra.mxu0 0.0
        %322 = vmatprep.subr.mxu0 0.0
        %323 = vmatpush2.msra.mxu0 0.0
        %324 = vmatprep.subr.mxu0 0.0
        %325 = vmatpush2.msra.mxu0 0.0
        %326 = vmatprep.subr.mxu0 0.0
        %327 = vmatpush2.msra.mxu0 0.0
        %328 = vmatprep.subr.mxu0 0.0
        %329 = vmatpush2.msra.mxu0 0.0
        %330 = vmatprep.subr.mxu0 0.0
        %331 = vmatpush2.msra.mxu0 0.0
        %332 = vmatprep.mubr.f32.mxu0 0.0
        %333 = vmatmul.mubr.f32.gmra.mxu0 %v258
        %v334 = vpop.f32.mrf.mxu0
        %v335 = vadd.f32 0.0, %v334
        %v336 = vpop.f32.mrf.mxu0
        %v337 = vadd.f32 0.0, %v336
        %338 = vmatprep.mubr.f32.mxu0 0.0
        %339 = vmatmul.mubr.f32.gmra.mxu0 %v261
        %v340 = vpop.f32.mrf.mxu0
        %v341 = vadd.f32 0.0, %v340
        %v342 = vpop.f32.mrf.mxu0
        %v343 = vadd.f32 0.0, %v342
        %344 = vdwg.mxu0
        %v345 = vmax.f32 %v335, %v337
        %346 = vmax.xlane.f32.xlu0 %v345
        %v347 = vpop.xlane.xlu0 %346
        %v348 = vmax.f32 %v341, %v343
        %349 = vmax.xlane.f32.xlu0 %v348
        %v350 = vpop.xlane.xlu0 %349
        %v351 = vsub.f32 %v335, %v347
        %v352 = vsub.f32 %v337, %v347
        %v353 = vsub.f32 %v341, %v350
        %v354 = vsub.f32 %v343, %v350
        %v355 = vmul.f32 %v351, 1.442695
        %v356 = vpow.pop %v355
        %v357 = vmul.f32 %v352, 1.442695
        %v358 = vpow.pop %v357
        %v359 = vmul.f32 %v353, 1.442695
        %v360 = vpow.pop %v359
        %v361 = vmul.f32 %v354, 1.442695
        %v362 = vpow.pop %v361
        %v363 = vadd.f32 %v356, %v358
        %364 = vadd.xlane.f32.xlu0 %v363
        %v365 = vpop.xlane.xlu0 %364
        %v366 = vadd.f32 %v360, %v362
        %367 = vadd.xlane.f32.xlu0 %v366
        %v368 = vpop.xlane.xlu0 %367
        %v369 = vrcp.pop %v365
        %v370 = vrcp.pop %v368
        %v371 = vmul.f32 %v356, %v369
        %v372 = vmul.f32 %v358, %v369
        %v373 = vmul.f32 %v360, %v370
        %v374 = vmul.f32 %v362, %v370
        %v375 = vld [vmem:[#allocation2] sm:$0xff]
        %vm376 = vcmask 130048
        %v378 = vsel %vm376, %v253, 0
        %380 = vmatprep.subr.mxu0 0.0
        %381 = vmatpush1.msra.mxu0 0.0
        %382 = vmatprep.subr.mxu0 0.0
        %383 = vmatpush1.msra.mxu0 0.0
        %384 = vmatprep.subr.mxu0 0.0
        %385 = vmatpush1.msra.mxu0 0.0
        %386 = vmatprep.subr.mxu0 0.0
        %387 = vmatpush1.msra.mxu0 0.0
        %388 = vmatprep.subr.mxu0 0.0
        %389 = vmatpush1.msra.mxu0 0.0
        %390 = vmatprep.subr.mxu0 0.0
        %391 = vmatpush1.msra.mxu0 0.0
        %392 = vmatprep.subr.mxu0 0.0
        %393 = vmatpush1.msra.mxu0 0.0
        %394 = vmatprep.subr.mxu0 0.0
        %395 = vmatpush1.msra.mxu0 0.0
        %396 = vmatprep.subr.mxu0 0.0
        %397 = vmatpush1.msra.mxu0 0.0
        %398 = vmatprep.subr.mxu0 0.0
        %399 = vmatpush1.msra.mxu0 0.0
        %400 = vmatprep.subr.mxu0 0.0
        %401 = vmatpush1.msra.mxu0 0.0
        %402 = vmatprep.subr.mxu0 0.0
        %403 = vmatpush1.msra.mxu0 0.0
        %404 = vmatprep.subr.mxu0 0.0
        %405 = vmatpush1.msra.mxu0 0.0
        %406 = vmatprep.subr.mxu0 0.0
        %407 = vmatpush1.msra.mxu0 0.0
        %408 = vmatprep.subr.mxu0 %v374
        %409 = vmatpush1.msra.mxu0 %v373
        %410 = vmatprep.subr.mxu0 %v372
        %411 = vmatpush1.msra.mxu0 %v371
        %412 = vmatprep.subr.mxu0 0.0
        %413 = vmatpush2.msra.mxu0 0.0
        %414 = vmatprep.subr.mxu0 0.0
        %415 = vmatpush2.msra.mxu0 0.0
        %416 = vmatprep.subr.mxu0 0.0
        %417 = vmatpush2.msra.mxu0 0.0
        %418 = vmatprep.subr.mxu0 0.0
        %419 = vmatpush2.msra.mxu0 0.0
        %420 = vmatprep.subr.mxu0 0.0
        %421 = vmatpush2.msra.mxu0 0.0
        %422 = vmatprep.subr.mxu0 0.0
        %423 = vmatpush2.msra.mxu0 0.0
        %424 = vmatprep.subr.mxu0 0.0
        %425 = vmatpush2.msra.mxu0 0.0
        %426 = vmatprep.subr.mxu0 0.0
        %427 = vmatpush2.msra.mxu0 0.0
        %428 = vmatprep.subr.mxu0 0.0
        %429 = vmatpush2.msra.mxu0 0.0
        %430 = vmatprep.subr.mxu0 0.0
        %431 = vmatpush2.msra.mxu0 0.0
        %432 = vmatprep.subr.mxu0 0.0
        %433 = vmatpush2.msra.mxu0 0.0
        %434 = vmatprep.subr.mxu0 0.0
        %435 = vmatpush2.msra.mxu0 0.0
        %436 = vmatprep.subr.mxu0 0.0
        %437 = vmatpush2.msra.mxu0 0.0
        %438 = vmatprep.subr.mxu0 0.0
        %439 = vmatpush2.msra.mxu0 0.0
        %440 = vmatprep.subr.mxu0 0.0
        %441 = vmatpush2.msra.mxu0 0.0
        %442 = vmatprep.subr.mxu0 0.0
        %443 = vmatpush2.msra.mxu0 0.0
        %444 = vmatprep.mubr.f32.mxu0 0.0
        %445 = vmatmul.mubr.f32.gmra.mxu0 %v378
        %v446 = vpop.f32.mrf.mxu0
        %v447 = vadd.f32 0.0, %v446
        %v448 = vpop.f32.mrf.mxu0
        %v449 = vadd.f32 0.0, %v448
        %450 = vdwg.mxu0
        %v453 = vcombine.low %v447, %v449
        %v455 = vadd.f32 %v375, %v453
        %456 = vst [vmem:[#allocation2] sm:$0xff] %v455
        // Predicated region
        $region37: #{tpu_custom_call.1} parent=31 // pred_check
          %p457 = pneg %p245
        $region38: #{tpu_custom_call.1} parent=31 // pred_check_branch
          %459 = sbr.rel (%p457) target = $region40
        $region39: #{tpu_custom_call.1} parent=31 // pred_region
          %v460 = vld [vmem:[#allocation2] sm:$0xff]
          %461 = vst [vmem:[%s222] sm:$0xff] %v460
        $region40: #{tpu_custom_call.1} parent=31 // pred_fallthru
          _
        %s462 = sand.u32 %s119, 1
        %s463 = scalar_lea.sflag [#allocation4], %s462
        %s464 = sand.u32 %s119, 1
        %s465 = smul.addr %s464, 8
        %s466 = scalar_lea.vmem [#allocation3], %s465
        // Predicated region
        $region41: #{tpu_custom_call.1} parent=31 // pred_check
          %p467 = pneg %p129
        $region42: #{tpu_custom_call.1} parent=31 // pred_check_branch
          %469 = sbr.rel (%p467) target = $region44
        $region43: #{tpu_custom_call.1} parent=31 // pred_region
          %s471 = ssub.s32 128, 128
          %472 = vsyncadd %s463, %s471
          %s473 = smul.addr %s21, 2
          %s474 = smul.addr %s473, 64
          %s475 = scalar_lea.hbm %s3, %s474
          %s477 = sshll.u32 %s466, 4
          %s478 = int_to_ptr.vmem [resolvable:$true] %s477
          %480 = dma.vmem_to_hbm [thread:$0]  %s478, 128, %s475, %s463
        $region44: #{tpu_custom_call.1} parent=31 // pred_fallthru
          _
      $region32: #{tpu_custom_call.1} parent=5 // pred_fallthru
        _
      %p481 = scmp.le.s32.totalorder 2, %s12
      // Predicated region
      $region45: #{tpu_custom_call.1} parent=5 // pred_check
        %p482 = pneg %p481
      $region46: #{tpu_custom_call.1} parent=5 // pred_check_branch
        %484 = sbr.rel (%p482) target = $region48
      $region47: #{tpu_custom_call.1} parent=5 // pred_region
        %s485 = ssub.s32 %s12, 2
        // Predicated region
        $region49: #{tpu_custom_call.1} parent=47 // pred_check
          %p486 = pneg %p135
        $region50: #{tpu_custom_call.1} parent=47 // pred_check_branch
          %488 = sbr.rel (%p486) target = $region52
        $region51: #{tpu_custom_call.1} parent=47 // pred_region
          %s489 = sand.u32 %s120, 1
          %s490 = scalar_lea.sflag [#allocation4], %s489
          %s491 = sand.u32 %s120, 1
          %s492 = smul.addr %s491, 8
          %s493 = scalar_lea.vmem [#allocation3], %s492
          %494 = dma.done %s490, 128
        $region52: #{tpu_custom_call.1} parent=47 // pred_fallthru
          _
      $region48: #{tpu_custom_call.1} parent=5 // pred_fallthru
        _
    $region6: #{tpu_custom_call.1} parent=1 // loop_footer
      %s16 = sadd.s32 1, %s12
    $region7: #{tpu_custom_call.1} parent=1 // loop_footer_branch
      %11 = sbr.rel target = $region3
    $region8: #{tpu_custom_call.1} parent=1 // loop_exit
      _
    %495 = vsyncpa [#allocation4], 1
    %s496 = scalar_lea.sflag [#allocation4], 1
    %497 = vsyncpa %s496, 1

</llo_original>
